<compile_context>
chip_gen: v5e
topology: v5e:2x2
jax: 0.10.0
libtpu: 0.0.40
codegen_flags: <defaults>
</compile_context>

<pallas_src>
import functools

import jax
import jax.numpy as jnp
from jax.experimental import pallas as pl
from jax.experimental.pallas import tpu as pltpu


_MAX_TL_OUT = 512                          # output lane tile (multiple of 128)
_TARGET_IN_BLOCK_BYTES = 2 * 1024 * 1024   # ~2 MiB input block per grid step
_VMEM_LIMIT_BYTES = 32 * 1024 * 1024       # safe on v5e/v6e/v7x


def _maxpool1d_kernel(x_ref, o_ref, xt_ref, *, factor):
    """Max over non-overlapping windows of `factor` along the lane axis.

    x_ref : (tr, tl_in)  input block; rows = flattened (N, C), L on lanes.
            tl_in >= tl_out * factor; trailing lanes (L%factor remainder or
            Pallas OOB-read padding) never feed a valid output column.
    o_ref : (tr, tl_out) output block (lane-dense).
    xt_ref: (tl_out * factor, tr) VMEM scratch for the transposed block.
    """
    tr, tl_out = o_ref.shape
    tl_eff = tl_out * factor

    # Pooled elements are lane-adjacent.  Lane-strided loads are not reliably
    # lowered by Mosaic, so move the pooled axis onto sublanes with one XLU
    # transpose, then reduce each window phase with native sublane-strided
    # reads of the scratch ref (no (tl_out, factor, tr) reshape temporary).
    xt_ref[...] = jnp.transpose(x_ref[:, :tl_eff], (1, 0))   # (tl_eff, tr)

    red = xt_ref[pl.ds(0, tl_out, stride=factor), :]          # (tl_out, tr)
    for k in range(1, factor):
        red = jnp.maximum(red, xt_ref[pl.ds(k, tl_out, stride=factor), :])

    o_ref[...] = jnp.transpose(red, (1, 0))                   # lane-dense store


def downsample(x_ncl, factor: int = 2):
    """MaxPool1d(factor, factor) over the last axis of an NCL tensor."""
    n, c, l = x_ncl.shape
    if factor == 1:                       # MaxPool1d(1, 1) is the identity
        return x_ncl
    l_out = l // factor
    if l_out == 0:
        raise ValueError(f"L={l} is smaller than the pooling factor={factor}")
    l_eff = l_out * factor
    r = n * c
    isz = jnp.dtype(x_ncl.dtype).itemsize
    sub = max(8, 32 // isz)               # dtype-native sublane multiple (8/16/32)

    # Free, contiguous reshape: (N, C, L) -> (N*C, L).  No HBM transpose/copy.
    x2 = x_ncl.reshape(r, l)

    # ---- lane tiles (pooled axis) ------------------------------------------
    if l_out <= _MAX_TL_OUT:
        tl_out = l_out                    # full output width in one block
        tl_in = l                         # full array width (always legal);
                                          # remainder lanes sliced inside kernel
    else:
        tl_out = _MAX_TL_OUT              # multiple of 128 -> lane-dense
        tl_in = tl_out * factor           # multiple of 128
        # Remainder columns (and OOB-read padding in the last lane tile) only
        # feed output columns >= l_out, which Pallas masks on store.
    tl_eff = tl_out * factor              # lanes actually pooled per block

    # ---- row (sublane) tile sized for ~2 MiB input blocks -------------------
    tr = max(1, _TARGET_IN_BLOCK_BYTES // (tl_in * isz))
    if tr < r:
        tr = max(sub, (tr // sub) * sub)
    tr = min(tr, r)

    # v7x megacore: guarantee >= 2 steps along a "parallel" axis when the whole
    # problem would otherwise collapse into a single grid step.
    if tr == r and tl_out >= l_out and r > sub:
        half = (((r + 1) // 2) + sub - 1) // sub * sub
        if half < r:
            tr = half

    grid = (pl.cdiv(r, tr), pl.cdiv(l_out, tl_out))

    cost = pl.CostEstimate(
        flops=int(r) * int(l_eff),        # ~one compare per pooled element
        transcendentals=0,
        bytes_accessed=int(r) * (int(l) + int(l_out)) * int(isz),
    )

    kernel = functools.partial(_maxpool1d_kernel, factor=factor)
    out2 = pl.pallas_call(
        kernel,
        out_shape=jax.ShapeDtypeStruct((r, l_out), x_ncl.dtype),
        grid=grid,
        in_specs=[pl.BlockSpec((tr, tl_in), lambda i, j: (i, j))],
        out_specs=pl.BlockSpec((tr, tl_out), lambda i, j: (i, j)),
        scratch_shapes=[pltpu.VMEM((tl_eff, tr), x_ncl.dtype)],
        compiler_params=pltpu.CompilerParams(
            dimension_semantics=("parallel", "parallel"),
            vmem_limit_bytes=_VMEM_LIMIT_BYTES,
        ),
        cost_estimate=cost,
    )(x2)

    # Free, contiguous reshape back to NCL: (N*C, L_out) -> (N, C, L_out).
    return out2.reshape(n, c, l_out)


if __name__ == "__main__":
    def ref_pool(x, factor):
        n_, c_, l_ = x.shape
        lo = l_ // factor
        return jnp.max(x[:, :, : lo * factor].reshape(n_, c_, lo, factor), axis=-1)

    key = jax.random.PRNGKey(0)

    # Base case matching the module's intended use.
    N, C, L, factor = 2, 4, 16, 2
    x = jax.random.normal(key, (N, C, L), dtype=jnp.float32)
    out = jax.block_until_ready(downsample(x, factor=factor))
    assert out.shape == (N, C, L // factor), out.shape
    assert out.dtype == x.dtype, out.dtype
    assert jnp.allclose(out, ref_pool(x, factor)), "mismatch (base case)"

    # Remainder case with multiple row blocks (partial last row block,
    # in-kernel tail slice).
    x2 = jax.random.normal(jax.random.PRNGKey(1), (2, 5, 33), dtype=jnp.float32)
    out2 = jax.block_until_ready(downsample(x2, factor=2))
    assert jnp.allclose(out2, ref_pool(x2, 2)), "mismatch (remainder, multi-row)"

    # Larger pooling factor.
    x3 = jax.random.normal(jax.random.PRNGKey(2), (2, 4, 16), dtype=jnp.float32)
    out3 = jax.block_until_ready(downsample(x3, factor=4))
    assert jnp.allclose(out3, ref_pool(x3, 4)), "mismatch (factor=4)"

    # l_out > 512 with L % factor != 0: exercises the tiled-lane branch where
    # the remainder falls in a partial, store-masked last lane tile.
    x4 = jax.random.normal(jax.random.PRNGKey(3), (3, 5, 1027), dtype=jnp.float32)
    out4 = jax.block_until_ready(downsample(x4, factor=2))
    assert out4.shape == (3, 5, 513), out4.shape
    assert jnp.allclose(out4, ref_pool(x4, 2)), "mismatch (tiled-lane remainder)"

    print("KERNEL_OK")
</pallas_src>

<mosaic_0001>
module attributes {stable_mosaic.version = 11 : i64} {
  func.func @_maxpool1d_kernel(%arg0: i32, %arg1: i32, %arg2: memref<8x16xf32, #tpu.memory_space<vmem>>, %arg3: memref<8x8xf32, #tpu.memory_space<vmem>>, %arg4: memref<16x8xf32, #tpu.memory_space<vmem>>) attributes {dimension_semantics = [#tpu.dimension_semantics<parallel>, #tpu.dimension_semantics<parallel>], iteration_bounds = array<i64: 1, 1>, scalar_prefetch = 0 : i64, scratch_operands = 1 : i64, tpu.core_type = #tpu.core_type<tc>, window_params = [{transform_indices = @transform_0, window_bounds = array<i64: 8, 16>}, {transform_indices = @transform_1, window_bounds = array<i64: 8, 8>}]} {
    %c0 = arith.constant 0 : index
    %c0_0 = arith.constant 0 : index
    %0 = vector.load %arg2[%c0, %c0_0] : memref<8x16xf32, #tpu.memory_space<vmem>>, vector<8x16xf32>
    %1 = tpu.transpose %0, [1, 0] : vector<8x16xf32> -> vector<16x8xf32>
    %c0_1 = arith.constant 0 : index
    %c0_2 = arith.constant 0 : index
    %2 = vector.load %arg4[%c0_1, %c0_2] : memref<16x8xf32, #tpu.memory_space<vmem>>, vector<16x8xf32>
    tpu.vector_store %arg4[%c0_1, %c0_2], %1 {strides = array<i32>} : memref<16x8xf32, #tpu.memory_space<vmem>>, vector<16x8xf32>,
    %c0_3 = arith.constant 0 : index
    %c0_4 = arith.constant 0 : index
    %3 = tpu.strided_load %arg4[%c0_3, %c0_4] {strides = array<i32: 2, 1>} : memref<16x8xf32, #tpu.memory_space<vmem>>, vector<8x8xf32>
    %c1 = arith.constant 1 : index
    %c0_5 = arith.constant 0 : index
    %4 = tpu.strided_load %arg4[%c1, %c0_5] {strides = array<i32: 2, 1>} : memref<16x8xf32, #tpu.memory_space<vmem>>, vector<8x8xf32>
    %5 = arith.maximumf %3, %4 : vector<8x8xf32>
    %6 = tpu.transpose %5, [1, 0] : vector<8x8xf32> -> vector<8x8xf32>
    %c0_6 = arith.constant 0 : index
    %c0_7 = arith.constant 0 : index
    %7 = vector.load %arg3[%c0_6, %c0_7] : memref<8x8xf32, #tpu.memory_space<vmem>>, vector<8x8xf32>
    tpu.vector_store %arg3[%c0_6, %c0_7], %6 {strides = array<i32>} : memref<8x8xf32, #tpu.memory_space<vmem>>, vector<8x8xf32>,
    return
  }
  func.func @transform_0(%arg0: i32, %arg1: i32) -> (i32, i32) {
    %c0_i32 = arith.constant 0 : i32
    return %arg0, %arg1 : i32, i32
  }
  func.func @transform_1(%arg0: i32, %arg1: i32) -> (i32, i32) {
    %c0_i32 = arith.constant 0 : i32
    return %arg0, %arg1 : i32, i32
  }
}

</mosaic_0001>

<llo_original>
// kernel: tpu_custom_call.1
$region0: #{tpu_custom_call.1}
  #allocation0 [shape = 'u32[]', space=smem, size = 0x4, offset = 0x4, fixed_abs, tag = 'smem constant byte address 0x4 - core index']
  #allocation1 [shape = 'u32[72,128]{1,0:T(1,128)}', space=vmem, size = 0x9000, scoped, tag = 'internal scratch']
  #allocation2 [shape = 'f32[16,8]{1,0:T(8,128)}', space=vmem, size = 0x2000, scoped, tag = 'scratch operand']
  %s0 = inlined_call_operand.hbm [shape: f32[8,16], index: 0, kind: input, shape index: {}]
  %s1 = inlined_call_operand.hbm [shape: f32[8,8], index: 1, kind: output, shape index: {}]
  %s2 = sld [smem:[#allocation0]]
  $region18: #{tpu_custom_call.1} parent=0
    _
  %s4 = ssub.s32 1, %s2
  %s5 = scalar_select 0, %s4, %s2
  $region1: #{tpu_custom_call.1} parent=0
    #allocation3 [shape = 'u8[4096]{0}', space=vmem, size = 0x1000, scoped, tag = 'input window, operand 0, single buffered']
    #allocation4 [shape = 's32[1]{0}', space=sflag, size = 0x4, scoped, tag = 'scoped memory for tpu_custom_call.1']
    #allocation5 [shape = 's32[1]{0}', space=sflag, size = 0x4, scoped, tag = 'scoped memory for tpu_custom_call.1']
    #allocation6 [shape = 'u8[4096]{0}', space=vmem, size = 0x1000, scoped, tag = 'output window, operand 0, single buffered']
    %6 = vsyncpa [#allocation4], 0
    %7 = vsyncpa [#allocation5], 0
    // Predicated region
    $region2: #{tpu_custom_call.1} parent=1 // pred_check
      _
    $region3: #{tpu_custom_call.1} parent=1 // pred_check_branch
      %9 = sbr.rel (0) target = $region5
    $region4: #{tpu_custom_call.1} parent=1 // pred_region
      %11 = vsyncadd [#allocation4], 0
      %s13 = sshll.u32 %s0, 4
      %s14 = int_to_ptr.hbm [resolvable:$true] %s13
      %s15 = sshll.u32 [#allocation3], 4
      %s16 = int_to_ptr.vmem [resolvable:$true] %s15
      %18 = dma.hbm_to_vmem [thread:$0]  %s14, 128, %s16, [#allocation4]
    $region5: #{tpu_custom_call.1} parent=1 // pred_fallthru
      _
    // Predicated region
    $region6: #{tpu_custom_call.1} parent=1 // pred_check
      _
    $region7: #{tpu_custom_call.1} parent=1 // pred_check_branch
      %20 = sbr.rel (0) target = $region9
    $region8: #{tpu_custom_call.1} parent=1 // pred_region
      %22 = dma.done [#allocation4], 128
    $region9: #{tpu_custom_call.1} parent=1 // pred_fallthru
      _
    %v23 = vld [vmem:[#allocation3] sm:$0xff]
    %24 = vxpose.xlu0.b32.start [1/16] %v23, 128
    %25 = vxpose.xlu0.b32.cont [2/16] 0.0, 128
    %26 = vxpose.xlu0.b32.cont [3/16] 0.0, 128
    %27 = vxpose.xlu0.b32.cont [4/16] 0.0, 128
    %28 = vxpose.xlu0.b32.cont [5/16] 0.0, 128
    %29 = vxpose.xlu0.b32.cont [6/16] 0.0, 128
    %30 = vxpose.xlu0.b32.cont [7/16] 0.0, 128
    %31 = vxpose.xlu0.b32.cont [8/16] 0.0, 128
    %32 = vxpose.xlu0.b32.cont [9/16] 0.0, 128
    %33 = vxpose.xlu0.b32.cont [10/16] 0.0, 128
    %34 = vxpose.xlu0.b32.cont [11/16] 0.0, 128
    %35 = vxpose.xlu0.b32.cont [12/16] 0.0, 128
    %36 = vxpose.xlu0.b32.cont [13/16] 0.0, 128
    %37 = vxpose.xlu0.b32.cont [14/16] 0.0, 128
    %38 = vxpose.xlu0.b32.cont [15/16] 0.0, 128
    %39 = vxpose.xlu0.b32.end [16/16] 0.0, 128
    %v40 = vpop.trf.xlu0
    %v41 = vpop.trf.xlu0
    %v42 = vpop.trf.xlu0
    %v43 = vpop.trf.xlu0
    %v44 = vpop.trf.xlu0
    %v45 = vpop.trf.xlu0
    %v46 = vpop.trf.xlu0
    %v47 = vpop.trf.xlu0
    %v48 = vpop.trf.xlu0
    %v49 = vpop.trf.xlu0
    %v50 = vpop.trf.xlu0
    %v51 = vpop.trf.xlu0
    %v52 = vpop.trf.xlu0
    %v53 = vpop.trf.xlu0
    %v54 = vpop.trf.xlu0
    %v55 = vpop.trf.xlu0
    %vm56 = vcmask 64512
    %57 = vst.msk [vmem:[#allocation2] sm:$0xff] %vm56, %v40
    %58 = vst.msk [vmem:[#allocation2 + $0x8] sm:$0xff] %vm56, %v41
    %v59 = vld [vmem:[#allocation2] ss:$2 sm:$0xff]
    %s60 = scalar_lea.vmem [#allocation2], 1
    %v61 = vld [vmem:[%s60] ss:$2 sm:$0xff]
    %v62 = vmax.f32 %v59, %v61
    %63 = vxpose.xlu0.b32.start [1/16] %v62, 128
    %64 = vxpose.xlu0.b32.cont [2/16] 0.0, 128
    %65 = vxpose.xlu0.b32.cont [3/16] 0.0, 128
    %66 = vxpose.xlu0.b32.cont [4/16] 0.0, 128
    %67 = vxpose.xlu0.b32.cont [5/16] 0.0, 128
    %68 = vxpose.xlu0.b32.cont [6/16] 0.0, 128
    %69 = vxpose.xlu0.b32.cont [7/16] 0.0, 128
    %70 = vxpose.xlu0.b32.cont [8/16] 0.0, 128
    %71 = vxpose.xlu0.b32.cont [9/16] 0.0, 128
    %72 = vxpose.xlu0.b32.cont [10/16] 0.0, 128
    %73 = vxpose.xlu0.b32.cont [11/16] 0.0, 128
    %74 = vxpose.xlu0.b32.cont [12/16] 0.0, 128
    %75 = vxpose.xlu0.b32.cont [13/16] 0.0, 128
    %76 = vxpose.xlu0.b32.cont [14/16] 0.0, 128
    %77 = vxpose.xlu0.b32.cont [15/16] 0.0, 128
    %78 = vxpose.xlu0.b32.end [16/16] 0.0, 128
    %v79 = vpop.trf.xlu0
    %v80 = vpop.trf.xlu0
    %v81 = vpop.trf.xlu0
    %v82 = vpop.trf.xlu0
    %v83 = vpop.trf.xlu0
    %v84 = vpop.trf.xlu0
    %v85 = vpop.trf.xlu0
    %v86 = vpop.trf.xlu0
    %v87 = vpop.trf.xlu0
    %v88 = vpop.trf.xlu0
    %v89 = vpop.trf.xlu0
    %v90 = vpop.trf.xlu0
    %v91 = vpop.trf.xlu0
    %v92 = vpop.trf.xlu0
    %v93 = vpop.trf.xlu0
    %v94 = vpop.trf.xlu0
    %95 = vst.msk [vmem:[#allocation6] sm:$0xff] %vm56, %v79
    // Predicated region
    $region10: #{tpu_custom_call.1} parent=1 // pred_check
      _
    $region11: #{tpu_custom_call.1} parent=1 // pred_check_branch
      %97 = sbr.rel (0) target = $region13
    $region12: #{tpu_custom_call.1} parent=1 // pred_region
      %99 = vsyncadd [#allocation5], 0
      %s101 = sshll.u32 [#allocation6], 4
      %s102 = int_to_ptr.vmem [resolvable:$true] %s101
      %s103 = sshll.u32 %s1, 4
      %s104 = int_to_ptr.hbm [resolvable:$true] %s103
      %106 = dma.vmem_to_hbm [thread:$0]  %s102, 128, %s104, [#allocation5]
    $region13: #{tpu_custom_call.1} parent=1 // pred_fallthru
      _
    // Predicated region
    $region14: #{tpu_custom_call.1} parent=1 // pred_check
      _
    $region15: #{tpu_custom_call.1} parent=1 // pred_check_branch
      %108 = sbr.rel (0) target = $region17
    $region16: #{tpu_custom_call.1} parent=1 // pred_region
      %110 = dma.done [#allocation5], 128
    $region17: #{tpu_custom_call.1} parent=1 // pred_fallthru
      _
    %111 = vsyncpa [#allocation4], 1
    %112 = vsyncpa [#allocation5], 1

</llo_original>
